<compile_context>
chip_gen: v5e
topology: v5e:2x2
jax: 0.10.0
libtpu: 0.0.40
codegen_flags: <defaults>
</compile_context>

<pallas_src>
import functools

import jax
import jax.numpy as jnp
from jax import lax
from jax.experimental import pallas as pl
from jax.experimental.pallas import tpu as pltpu


def _attention_kernel(x_ref, w1_ref, b1_ref, w2_ref, b2_ref,
                      yprob_ref, attn_ref, *, box):
    rows, L = x_ref.shape               # rows = TB * box  (2-D feature slab)
    tb = rows // box

    x = x_ref[...]                      # input dtype (f32 or bf16), zero-copy view

    # ---- Stage 1: hidden = tanh(X @ W1 + b1) --------------------------------
    # One MXU matmul for all TB images, f32 accumulation, tanh on the EUP.
    w1 = w1_ref[...]
    if w1.dtype != x.dtype:
        w1 = w1.astype(x.dtype)         # tiny (L, D); keeps MXU operands matched
    h = jnp.tanh(
        jnp.dot(x, w1, preferred_element_type=jnp.float32) + b1_ref[...]
    )                                   # (rows, D) f32

    # ---- Stage 2: per-box score = h . w2 + b2 on the VPU --------------------
    # (avoids a 1-wide MXU matmul / result-FIFO drain; b2 is an SMEM scalar)
    s = jnp.sum(h * w2_ref[...], axis=-1) + b2_ref[0, 0]        # (rows,) f32

    # ---- Stage 3a: per-image softmax for the attention-score output ---------
    # Only this tiny score vector is reshaped to (TB, box); the big feature slab
    # is never relayouted, even when box % 8 != 0.
    s2 = s.reshape(tb, box)
    m = jnp.max(s2, axis=-1, keepdims=True)
    e = jnp.exp(s2 - m)
    a = e / jnp.sum(e, axis=-1, keepdims=True)                   # (TB, box) f32
    attn_ref[...] = a.astype(attn_ref.dtype)

    # ---- Stage 3b: pooling Y[t] = sum_b a[t,b] * x[t*box+b] -----------------
    # Build the block-diagonal softmax matrix S (TB, rows) with a masked softmax
    # over the broadcast score row, then do ONE MXU matmul S @ X with f32
    # accumulation.  No f32 copy of the slab, no (TB, box, L) relayout, no
    # full-size product temporary.
    col = lax.broadcasted_iota(jnp.int32, (tb, rows), 1)
    row = lax.broadcasted_iota(jnp.int32, (tb, rows), 0)
    lo = row * box
    diag = (col >= lo) & (col < lo + box)
    logits = jnp.where(diag, s[None, :], jnp.float32(-1e30))     # (TB, rows)
    mb = jnp.max(logits, axis=-1, keepdims=True)
    eb = jnp.exp(logits - mb)                                    # off-diagonal -> 0
    S = eb / jnp.sum(eb, axis=-1, keepdims=True)                 # block-diag softmax
    if x.dtype != jnp.float32:
        S = S.astype(x.dtype)                                    # bf16 MXU path
    yprob_ref[...] = jnp.dot(
        S, x, preferred_element_type=jnp.float32).astype(yprob_ref.dtype)


def _plan_tiles(batch_size, box, L, x_itemsize):
    """Pick (TB, padded_batch).

    Goals (perf review):
      * feature slab of ~2-8 MiB per step so DMA dwarfs the ~0.35us step overhead
      * TB % 8 == 0 so all (TB, ...) output blocks are sublane-aligned
      * grid >= 2 so both v7x TensorCores get work
      * the block-diagonal pooling matrix (TB, TB*box) kept <= ~256 KiB so its
        extra MXU flops stay hidden under the HBM DMA
    Prefers a TB that divides batch_size exactly (no padding copy); only pads the
    batch (one extra HBM pass) when no aligned divisor exists in range.
    """
    bpi = box * L * x_itemsize                                  # bytes per image
    x_tgt = max(8, (4 << 20) // bpi)                            # ~4 MiB slab
    x_cap = max(8, (8 << 20) // bpi)                            # <= 8 MiB slab
    s_cap = max(8, int(((256 << 10) // (4 * box)) ** 0.5))      # pooling matrix cap
    half = (batch_size // 2) // 8 * 8                           # keep grid >= 2

    if half < 8:
        # tiny batch: one full-extent step (block == full array dims is legal)
        return batch_size, batch_size

    hi = max(8, min(x_cap, s_cap, half) // 8 * 8)
    tgt = max(8, min(x_tgt, hi) // 8 * 8)

    divisors = [d for d in range(8, hi + 1, 8) if batch_size % d == 0]
    if divisors:
        below = [d for d in divisors if d <= tgt]
        return (max(below) if below else min(divisors)), batch_size

    # No aligned divisor: pad the batch with zero images (rare path, one HBM copy).
    tb = tgt
    while tb > 8 and (-batch_size) % tb > max(tb // 2, batch_size // 8):
        tb -= 8
    return tb, -(-batch_size // tb) * tb


def attention_forward(features, batch_size, w1, b1, w2, b2):
    """Pallas equivalent of Attention.forward(features, batch_size).

    `features` is used in whatever dtype it arrives (f32 or bf16) — no wrapper
    cast/reshape HBM pass.  Accumulation, tanh, softmax and pooling stay f32.
    """
    n, L = features.shape
    assert n % batch_size == 0, "features rows must be divisible by batch_size"
    box = n // batch_size
    D = w1.shape[1]

    x_item = jnp.dtype(features.dtype).itemsize
    tb, padded_batch = _plan_tiles(batch_size, box, L, x_item)
    rows = tb * box
    grid = (padded_batch // tb,)

    x = features
    if padded_batch != batch_size:
        x = jnp.pad(features, ((0, (padded_batch - batch_size) * box), (0, 0)))

    b1_2d = b1.reshape(1, D).astype(jnp.float32)
    w2_row = w2.reshape(1, D).astype(jnp.float32)     # (D, 1) -> row (1, D)
    b2_2d = b2.reshape(1, 1).astype(jnp.float32)      # SMEM scalar

    n_pad = padded_batch * box
    w_item = jnp.dtype(w1.dtype).itemsize
    cost = pl.CostEstimate(
        flops=2 * n_pad * L * D + 4 * n_pad * D + 2 * tb * n_pad * L + 3 * n_pad,
        transcendentals=n_pad * D + 2 * n_pad,            # tanh + exp (both softmaxes)
        bytes_accessed=n_pad * L * x_item + L * D * w_item + (2 * D + 1) * 4
                       + padded_batch * (L + box) * 4,
    )

    # VMEM budget: double-buffered slab / weights / outputs + in-kernel temporaries.
    # (Weight blocks have a constant block index; pipeline_mode=pl.Buffered(1) could
    #  drop their second buffer on v7x, but we stay far below the 64 MiB ceiling.)
    x_blk = rows * L * x_item
    w_blk = L * D * w_item + 2 * D * 4 + 4
    out_blk = tb * (L + box) * 4
    tmp = rows * D * 4 + 6 * tb * rows * 4 + tb * L * 4
    budget = 2 * (x_blk + w_blk + out_blk) + tmp
    vmem_limit = int(min(max(2 * budget, 32 << 20), 64 << 20))

    kernel = functools.partial(_attention_kernel, box=box)

    y_prob, attention_scores = pl.pallas_call(
        kernel,
        out_shape=(
            jax.ShapeDtypeStruct((padded_batch, L), jnp.float32),
            jax.ShapeDtypeStruct((padded_batch, box), jnp.float32),
        ),
        grid_spec=pltpu.PrefetchScalarGridSpec(
            num_scalar_prefetch=0,
            grid=grid,
            in_specs=[
                pl.BlockSpec((rows, L), lambda g: (g, 0)),           # 2-D feature slab
                pl.BlockSpec((L, D), lambda g: (0, 0)),              # W1 (resident)
                pl.BlockSpec((1, D), lambda g: (0, 0)),              # b1
                pl.BlockSpec((1, D), lambda g: (0, 0)),              # W2 row
                pl.BlockSpec(memory_space=pltpu.MemorySpace.SMEM),   # b2 scalar
            ],
            out_specs=[
                pl.BlockSpec((tb, L), lambda g: (g, 0)),             # Y_prob rows
                pl.BlockSpec((tb, box), lambda g: (g, 0)),           # attention scores
            ],
        ),
        compiler_params=pltpu.CompilerParams(
            dimension_semantics=("parallel",),                       # megacore sharding
            vmem_limit_bytes=vmem_limit,
        ),
        cost_estimate=cost,
    )(x, w1, b1_2d, w2_row, b2_2d)

    if padded_batch != batch_size:
        y_prob = y_prob[:batch_size]
        attention_scores = attention_scores[:batch_size]
    return y_prob, attention_scores


def _reference_forward(features, batch_size, w1, b1, w2, b2):
    """Pure-JAX reference mirroring the PyTorch per-image loop."""
    n, L = features.shape
    box = n // batch_size
    x = features.reshape(batch_size, box, L).astype(jnp.float32)
    h = jnp.tanh(jnp.einsum("bnl,ld->bnd", x, w1) + b1)
    s = jnp.einsum("bnd,dk->bnk", h, w2) + b2           # (batch, box, 1)
    a = jax.nn.softmax(s[..., 0], axis=-1)              # (batch, box)
    m = jnp.einsum("bn,bnl->bl", a, x)                  # (batch, L)
    return m, a


if __name__ == "__main__":
    # Small shapes consistent with the module: L=in_features, D=embedding, K=1
    L, D, K = 128, 32, 1
    batch_size, box_per_image = 16, 8       # grid=(2,): exercises tiling + megacore

    key = jax.random.PRNGKey(0)
    k_feat, k_w1, k_b1, k_w2, k_b2 = jax.random.split(key, 5)

    w1 = jax.random.normal(k_w1, (L, D), dtype=jnp.float32) * 0.1
    b1 = jax.random.normal(k_b1, (D,), dtype=jnp.float32) * 0.1
    w2 = jax.random.normal(k_w2, (D, K), dtype=jnp.float32) * 0.1
    b2 = jax.random.normal(k_b2, (K,), dtype=jnp.float32) * 0.1

    features = jax.random.normal(
        k_feat, (batch_size * box_per_image, L), dtype=jnp.float32)

    y_ref, a_ref = _reference_forward(features, batch_size, w1, b1, w2, b2)

    # float32 path (exact, 1e-5 tolerance)
    y_prob, attn_scores = attention_forward(features, batch_size, w1, b1, w2, b2)
    y_prob = jax.block_until_ready(y_prob)
    attn_scores = jax.block_until_ready(attn_scores)
    assert y_prob.shape == (batch_size, L)
    assert attn_scores.shape == (batch_size, box_per_image)
    assert jnp.allclose(y_prob, y_ref, atol=1e-5, rtol=1e-5)
    assert jnp.allclose(attn_scores, a_ref, atol=1e-5, rtol=1e-5)

    # bf16 features supplied by the producer (no wrapper cast inside the kernel
    # wrapper): halves HBM reads on v6e/v7x, f32 accumulation inside.
    features_bf16 = features.astype(jnp.bfloat16)
    y_bf, a_bf = attention_forward(features_bf16, batch_size, w1, b1, w2, b2)
    y_bf = jax.block_until_ready(y_bf)
    a_bf = jax.block_until_ready(a_bf)
    assert jnp.allclose(y_bf, y_ref, atol=5e-2, rtol=5e-2)
    assert jnp.allclose(a_bf, a_ref, atol=5e-2, rtol=5e-2)

    print("KERNEL_OK")
</pallas_src>

<mosaic_0001>
module attributes {stable_mosaic.version = 11 : i64} {
  func.func @_attention_kernel(%arg0: i32, %arg1: memref<64x128xf32, #tpu.memory_space<vmem>>, %arg2: memref<128x32xf32, #tpu.memory_space<vmem>>, %arg3: memref<1x32xf32, #tpu.memory_space<vmem>>, %arg4: memref<1x32xf32, #tpu.memory_space<vmem>>, %arg5: memref<1x1xf32, #tpu.memory_space<smem>>, %arg6: memref<8x128xf32, #tpu.memory_space<vmem>>, %arg7: memref<8x8xf32, #tpu.memory_space<vmem>>) attributes {dimension_semantics = [#tpu.dimension_semantics<parallel>], iteration_bounds = array<i64: 2>, scalar_prefetch = 0 : i64, scratch_operands = 0 : i64, tpu.core_type = #tpu.core_type<tc>, window_params = [{transform_indices = @transform_0, window_bounds = array<i64: 64, 128>}, {pipeline_mode = #tpu.pipeline_mode<synchronous>, transform_indices = @transform_1, window_bounds = array<i64: 128, 32>}, {pipeline_mode = #tpu.pipeline_mode<synchronous>, transform_indices = @transform_2, window_bounds = array<i64: 1, 32>}, {pipeline_mode = #tpu.pipeline_mode<synchronous>, transform_indices = @transform_3, window_bounds = array<i64: 1, 32>}, {transform_indices = @transform_4, window_bounds = array<i64: 1, 1>}, {transform_indices = @transform_5, window_bounds = array<i64: 8, 128>}, {transform_indices = @transform_6, window_bounds = array<i64: 8, 8>}]} {
    %c0 = arith.constant 0 : index
    %c0_0 = arith.constant 0 : index
    %0 = vector.load %arg1[%c0, %c0_0] : memref<64x128xf32, #tpu.memory_space<vmem>>, vector<64x128xf32>
    %c0_1 = arith.constant 0 : index
    %c0_2 = arith.constant 0 : index
    %1 = vector.load %arg2[%c0_1, %c0_2] : memref<128x32xf32, #tpu.memory_space<vmem>>, vector<128x32xf32>
    %cst = arith.constant dense<0.000000e+00> : vector<64x32xf32>
    %2 = tpu.matmul %0, %1, %cst {dimension_numbers = #tpu.dot_dimension_numbers<[1], [0], [0], [1], [0, 0, 1, 1], [], []>} : vector<64x128xf32>, vector<128x32xf32>, vector<64x32xf32> -> vector<64x32xf32>
    %c0_3 = arith.constant 0 : index
    %c0_4 = arith.constant 0 : index
    %3 = vector.load %arg3[%c0_3, %c0_4] : memref<1x32xf32, #tpu.memory_space<vmem>>, vector<1x32xf32>
    %4 = vector.broadcast %3 : vector<1x32xf32> to vector<64x32xf32>
    %5 = arith.addf %2, %4 : vector<64x32xf32>
    %6 = math.tanh %5 : vector<64x32xf32>
    %c0_5 = arith.constant 0 : index
    %c0_6 = arith.constant 0 : index
    %7 = vector.load %arg4[%c0_5, %c0_6] : memref<1x32xf32, #tpu.memory_space<vmem>>, vector<1x32xf32>
    %8 = vector.broadcast %7 : vector<1x32xf32> to vector<64x32xf32>
    %9 = arith.mulf %6, %8 : vector<64x32xf32>
    %cst_7 = arith.constant dense<0.000000e+00> : vector<64xf32>
    %10 = vector.multi_reduction <add>, %9, %cst_7 [1] : vector<64x32xf32> to vector<64xf32>
    %c0_8 = arith.constant 0 : index
    %c0_9 = arith.constant 0 : index
    %11 = memref.load %arg5[%c0_8, %c0_9] : memref<1x1xf32, #tpu.memory_space<smem>>
    %12 = vector.broadcast %11 : f32 to vector<64xf32>
    %13 = arith.addf %10, %12 : vector<64xf32>
    %14 = vector.shape_cast %13 : vector<64xf32> to vector<8x8xf32>
    %cst_10 = arith.constant dense<0xFF800000> : vector<8xf32>
    %15 = vector.multi_reduction <maximumf>, %14, %cst_10 [1] : vector<8x8xf32> to vector<8xf32>
    %16 = vector.shape_cast %15 : vector<8xf32> to vector<8x1xf32>
    %17 = vector.broadcast %16 : vector<8x1xf32> to vector<8x8xf32>
    %18 = arith.subf %14, %17 : vector<8x8xf32>
    %19 = math.exp %18 : vector<8x8xf32>
    %cst_11 = arith.constant dense<0.000000e+00> : vector<8xf32>
    %20 = vector.multi_reduction <add>, %19, %cst_11 [1] : vector<8x8xf32> to vector<8xf32>
    %21 = vector.shape_cast %20 : vector<8xf32> to vector<8x1xf32>
    %22 = vector.broadcast %21 : vector<8x1xf32> to vector<8x8xf32>
    %23 = arith.divf %19, %22 : vector<8x8xf32>
    %c0_12 = arith.constant 0 : index
    %c0_13 = arith.constant 0 : index
    %24 = vector.load %arg7[%c0_12, %c0_13] : memref<8x8xf32, #tpu.memory_space<vmem>>, vector<8x8xf32>
    tpu.vector_store %arg7[%c0_12, %c0_13], %23 {strides = array<i32>} : memref<8x8xf32, #tpu.memory_space<vmem>>, vector<8x8xf32>,
    %25 = tpu.iota {dimensions = array<i32: 1>} : vector<8x64xi32>
    %26 = tpu.iota {dimensions = array<i32: 0>} : vector<8x64xi32>
    %c8_i32 = arith.constant 8 : i32
    %27 = vector.broadcast %c8_i32 : i32 to vector<8x64xi32>
    %28 = arith.muli %26, %27 : vector<8x64xi32>
    %29 = arith.cmpi sge, %25, %28 : vector<8x64xi32>
    %c8_i32_14 = arith.constant 8 : i32
    %30 = vector.broadcast %c8_i32_14 : i32 to vector<8x64xi32>
    %31 = arith.addi %28, %30 : vector<8x64xi32>
    %32 = arith.cmpi slt, %25, %31 : vector<8x64xi32>
    %33 = arith.andi %29, %32 : vector<8x64xi1>
    %34 = vector.shape_cast %13 : vector<64xf32> to vector<1x64xf32>
    %cst_15 = arith.constant -1.000000e+30 : f32
    %35 = vector.shape_cast %34 : vector<1x64xf32> to vector<1x64xf32>
    %36 = vector.broadcast %35 : vector<1x64xf32> to vector<8x64xf32>
    %37 = vector.broadcast %cst_15 : f32 to vector<8x64xf32>
    %38 = arith.select %33, %36, %37 : vector<8x64xi1>, vector<8x64xf32>
    %cst_16 = arith.constant dense<0xFF800000> : vector<8xf32>
    %39 = vector.multi_reduction <maximumf>, %38, %cst_16 [1] : vector<8x64xf32> to vector<8xf32>
    %40 = vector.shape_cast %39 : vector<8xf32> to vector<8x1xf32>
    %41 = vector.broadcast %40 : vector<8x1xf32> to vector<8x64xf32>
    %42 = arith.subf %38, %41 : vector<8x64xf32>
    %43 = math.exp %42 : vector<8x64xf32>
    %cst_17 = arith.constant dense<0.000000e+00> : vector<8xf32>
    %44 = vector.multi_reduction <add>, %43, %cst_17 [1] : vector<8x64xf32> to vector<8xf32>
    %45 = vector.shape_cast %44 : vector<8xf32> to vector<8x1xf32>
    %46 = vector.broadcast %45 : vector<8x1xf32> to vector<8x64xf32>
    %47 = arith.divf %43, %46 : vector<8x64xf32>
    %cst_18 = arith.constant dense<0.000000e+00> : vector<8x128xf32>
    %48 = tpu.matmul %47, %0, %cst_18 {dimension_numbers = #tpu.dot_dimension_numbers<[1], [0], [0], [1], [0, 0, 1, 1], [], []>} : vector<8x64xf32>, vector<64x128xf32>, vector<8x128xf32> -> vector<8x128xf32>
    %c0_19 = arith.constant 0 : index
    %c0_20 = arith.constant 0 : index
    %49 = vector.load %arg6[%c0_19, %c0_20] : memref<8x128xf32, #tpu.memory_space<vmem>>, vector<8x128xf32>
    tpu.vector_store %arg6[%c0_19, %c0_20], %48 {strides = array<i32>} : memref<8x128xf32, #tpu.memory_space<vmem>>, vector<8x128xf32>,
    return
  }
  func.func @transform_0(%arg0: i32) -> (i32, i32) {
    %c0_i32 = arith.constant 0 : i32
    %c0_i32_0 = arith.constant 0 : i32
    return %arg0, %c0_i32 : i32, i32
  }
  func.func @transform_1(%arg0: i32) -> (i32, i32) {
    %c0_i32 = arith.constant 0 : i32
    %c0_i32_0 = arith.constant 0 : i32
    %c0_i32_1 = arith.constant 0 : i32
    return %c0_i32, %c0_i32_0 : i32, i32
  }
  func.func @transform_2(%arg0: i32) -> (i32, i32) {
    %c0_i32 = arith.constant 0 : i32
    %c0_i32_0 = arith.constant 0 : i32
    %c0_i32_1 = arith.constant 0 : i32
    return %c0_i32, %c0_i32_0 : i32, i32
  }
  func.func @transform_3(%arg0: i32) -> (i32, i32) {
    %c0_i32 = arith.constant 0 : i32
    %c0_i32_0 = arith.constant 0 : i32
    %c0_i32_1 = arith.constant 0 : i32
    return %c0_i32, %c0_i32_0 : i32, i32
  }
  func.func @transform_4(%arg0: i32) -> (i32, i32) {
    %c0_i32 = arith.constant 0 : i32
    %c0_i32_0 = arith.constant 0 : i32
    %c0_i32_1 = arith.constant 0 : i32
    return %c0_i32, %c0_i32_0 : i32, i32
  }
  func.func @transform_5(%arg0: i32) -> (i32, i32) {
    %c0_i32 = arith.constant 0 : i32
    %c0_i32_0 = arith.constant 0 : i32
    return %arg0, %c0_i32 : i32, i32
  }
  func.func @transform_6(%arg0: i32) -> (i32, i32) {
    %c0_i32 = arith.constant 0 : i32
    %c0_i32_0 = arith.constant 0 : i32
    return %arg0, %c0_i32 : i32, i32
  }
}

</mosaic_0001>

<llo_original>
// kernel: tpu_custom_call.1
$region0: #{tpu_custom_call.1}
  #allocation0 [shape = 'u32[]', space=smem, size = 0x4, offset = 0x4, fixed_abs, tag = 'smem constant byte address 0x4 - core index']
  #allocation1 [shape = 'u32[72,128]{1,0:T(1,128)}', space=vmem, size = 0x9000, scoped, tag = 'internal scratch']
  #allocation2 [shape = 'f32[1,1]{1,0:T(1,128)S(6)}', space=smem, size = 0x200, scoped, tag = 'scoped memory for tpu_custom_call.1']
  %s0 = inlined_call_operand.vmem [shape: f32[128,128], index: 0, kind: input, shape index: {}]
  %s1 = inlined_call_operand.vmem [shape: f32[128,32], index: 1, kind: input, shape index: {}]
  %s2 = inlined_call_operand.vmem [shape: f32[1,32], index: 2, kind: input, shape index: {}]
  %s3 = inlined_call_operand.vmem [shape: f32[1,32], index: 3, kind: input, shape index: {}]
  %s4 = inlined_call_operand.<no memory space> [shape: f32[1,1], index: 4, kind: input, shape index: {}]
  %s5 = inlined_call_operand.hbm [shape: f32[16,128], index: 5, kind: output, shape index: {0}]
  %s6 = inlined_call_operand.vmem [shape: f32[16,8], index: 6, kind: output, shape index: {1}]
  %7 = xla_tuple %s5, %s6
  %s8 = sld [smem:[#allocation0]]
  $region61: #{tpu_custom_call.1} parent=0
    _
  %s10 = ssub.s32 1, %s8
  %s11 = scalar_select 0, %s10, %s8
  %12 = sst [smem:[#allocation2]] %s4
  $region1: #{tpu_custom_call.1} parent=0
    #allocation3 [shape = 'u8[8192]{0}', space=vmem, size = 0x2000, scoped, tag = 'output window, operand 0']
    #allocation4 [shape = 's32[2]{0}', space=sflag, size = 0x8, scoped, tag = 'scoped memory for tpu_custom_call.1']
    %13 = vsyncpa [#allocation4], 0
    %s14 = scalar_lea.sflag [#allocation4], 1
    %15 = vsyncpa %s14, 0
    loop: start=0, step=1, limit=4
    $region2: #{tpu_custom_call.1} parent=1 // loop_pre_header
      _
    $region3: #{tpu_custom_call.1} parent=1 // loop_header
      %s17 = sphi 0, %s21
      %p18 = scmp.ge.s32.totalorder %s17, 4
      %s27 = sphi 0, %s29
      %s30 = sphi 0, %s27
      %s31 = sphi 0, %s30
      %s47 = sphi 0, %s31
      %s51 = sphi 0, %s51
      %s53 = sphi 0, %s51
      %s54 = sphi 0, %s53
      %s68 = sphi 0, %s54
      %s72 = sphi 0, %s72
      %s74 = sphi 0, %s72
      %s75 = sphi 0, %s74
      %s89 = sphi 0, %s75
      %s93 = sphi 0, %s93
      %s95 = sphi 0, %s93
      %s96 = sphi 0, %s95
      %s110 = sphi 0, %s96
      %s114 = sphi 0, %s114
      %s116 = sphi 0, %s114
      %s117 = sphi 0, %s116
      %s131 = sphi 0, %s117
      %s137 = sphi 0, %s139
      %s140 = sphi 0, %s137
      %s141 = sphi 0, %s140
      %s157 = sphi 0, %s141
      %s163 = sphi 0, %s165
      %s166 = sphi 0, %s163
      %s167 = sphi 0, %s166
      %s183 = sphi 0, %s167
    $region4: #{tpu_custom_call.1} parent=1 // loop_header_branch
      %20 = sbr.rel (%p18) target = $region8
    $region5: #{tpu_custom_call.1} parent=1 // loop_body
      %s22 = ssub.s32 %s17, 1
      %s23 = ssub.s32 %s17, 2
      %s24 = sadd.s32 %s17, 1
      %s25 = ssub.s32 %s17, %s24
      %p26 = scmp.eq.s32.totalorder %s25, 0
      %s28 = sadd.s32 %s27, 1
      %s29 = scalar_select %p26, %s27, %s28
      %p32 = pneg %p26
      %p33 = scmp.eq.s32.totalorder %s17, 1
      %p34 = por %p32, %p33
      %p35 = scmp.ne.s32.totalorder %s27, %s30
      %p36 = scmp.eq.s32.totalorder %s17, 0
      %p37 = por %p35, %p36
      %p38 = scmp.ne.s32.totalorder %s27, %s30
      %p39 = scmp.eq.s32.totalorder %s22, 1
      %p40 = por %p38, %p39
      %p41 = scmp.ne.s32.totalorder %s30, %s31
      %p42 = scmp.eq.s32.totalorder %s22, 0
      %p43 = por %p41, %p42
      %p44 = scmp.ne.s32.totalorder %s30, %s31
      %p45 = scmp.eq.s32.totalorder %s23, 1
      %p46 = por %p44, %p45
      %p48 = scmp.ne.s32.totalorder %s31, %s47
      %p49 = scmp.eq.s32.totalorder %s23, 0
      %p50 = por %p48, %p49
      %s52 = sadd.s32 %s51, 1
      %p55 = scmp.eq.s32.totalorder %s17, 1
      %p56 = scmp.ne.s32.totalorder %s51, %s53
      %p57 = scmp.eq.s32.totalorder %s17, 0
      %p58 = por %p56, %p57
      %p59 = scmp.ne.s32.totalorder %s51, %s53
      %p60 = scmp.eq.s32.totalorder %s22, 1
      %p61 = por %p59, %p60
      %p62 = scmp.ne.s32.totalorder %s53, %s54
      %p63 = scmp.eq.s32.totalorder %s22, 0
      %p64 = por %p62, %p63
      %p65 = scmp.ne.s32.totalorder %s53, %s54
      %p66 = scmp.eq.s32.totalorder %s23, 1
      %p67 = por %p65, %p66
      %p69 = scmp.ne.s32.totalorder %s54, %s68
      %p70 = scmp.eq.s32.totalorder %s23, 0
      %p71 = por %p69, %p70
      %s73 = sadd.s32 %s72, 1
      %p76 = scmp.eq.s32.totalorder %s17, 1
      %p77 = scmp.ne.s32.totalorder %s72, %s74
      %p78 = scmp.eq.s32.totalorder %s17, 0
      %p79 = por %p77, %p78
      %p80 = scmp.ne.s32.totalorder %s72, %s74
      %p81 = scmp.eq.s32.totalorder %s22, 1
      %p82 = por %p80, %p81
      %p83 = scmp.ne.s32.totalorder %s74, %s75
      %p84 = scmp.eq.s32.totalorder %s22, 0
      %p85 = por %p83, %p84
      %p86 = scmp.ne.s32.totalorder %s74, %s75
      %p87 = scmp.eq.s32.totalorder %s23, 1
      %p88 = por %p86, %p87
      %p90 = scmp.ne.s32.totalorder %s75, %s89
      %p91 = scmp.eq.s32.totalorder %s23, 0
      %p92 = por %p90, %p91
      %s94 = sadd.s32 %s93, 1
      %p97 = scmp.eq.s32.totalorder %s17, 1
      %p98 = scmp.ne.s32.totalorder %s93, %s95
      %p99 = scmp.eq.s32.totalorder %s17, 0
      %p100 = por %p98, %p99
      %p101 = scmp.ne.s32.totalorder %s93, %s95
      %p102 = scmp.eq.s32.totalorder %s22, 1
      %p103 = por %p101, %p102
      %p104 = scmp.ne.s32.totalorder %s95, %s96
      %p105 = scmp.eq.s32.totalorder %s22, 0
      %p106 = por %p104, %p105
      %p107 = scmp.ne.s32.totalorder %s95, %s96
      %p108 = scmp.eq.s32.totalorder %s23, 1
      %p109 = por %p107, %p108
      %p111 = scmp.ne.s32.totalorder %s96, %s110
      %p112 = scmp.eq.s32.totalorder %s23, 0
      %p113 = por %p111, %p112
      %s115 = sadd.s32 %s114, 1
      %p118 = scmp.eq.s32.totalorder %s17, 1
      %p119 = scmp.ne.s32.totalorder %s114, %s116
      %p120 = scmp.eq.s32.totalorder %s17, 0
      %p121 = por %p119, %p120
      %p122 = scmp.ne.s32.totalorder %s114, %s116
      %p123 = scmp.eq.s32.totalorder %s22, 1
      %p124 = por %p122, %p123
      %p125 = scmp.ne.s32.totalorder %s116, %s117
      %p126 = scmp.eq.s32.totalorder %s22, 0
      %p127 = por %p125, %p126
      %p128 = scmp.ne.s32.totalorder %s116, %s117
      %p129 = scmp.eq.s32.totalorder %s23, 1
      %p130 = por %p128, %p129
      %p132 = scmp.ne.s32.totalorder %s117, %s131
      %p133 = scmp.eq.s32.totalorder %s23, 0
      %p134 = por %p132, %p133
      %s135 = ssub.s32 %s17, %s24
      %p136 = scmp.eq.s32.totalorder %s135, 0
      %s138 = sadd.s32 %s137, 1
      %s139 = scalar_select %p136, %s137, %s138
      %p142 = pneg %p136
      %p143 = scmp.eq.s32.totalorder %s17, 1
      %p144 = por %p142, %p143
      %p145 = scmp.ne.s32.totalorder %s137, %s140
      %p146 = scmp.eq.s32.totalorder %s17, 0
      %p147 = por %p145, %p146
      %p148 = scmp.ne.s32.totalorder %s137, %s140
      %p149 = scmp.eq.s32.totalorder %s22, 1
      %p150 = por %p148, %p149
      %p151 = scmp.ne.s32.totalorder %s140, %s141
      %p152 = scmp.eq.s32.totalorder %s22, 0
      %p153 = por %p151, %p152
      %p154 = scmp.ne.s32.totalorder %s140, %s141
      %p155 = scmp.eq.s32.totalorder %s23, 1
      %p156 = por %p154, %p155
      %p158 = scmp.ne.s32.totalorder %s141, %s157
      %p159 = scmp.eq.s32.totalorder %s23, 0
      %p160 = por %p158, %p159
      %s161 = ssub.s32 %s17, %s24
      %p162 = scmp.eq.s32.totalorder %s161, 0
      %s164 = sadd.s32 %s163, 1
      %s165 = scalar_select %p162, %s163, %s164
      %p168 = pneg %p162
      %p169 = scmp.eq.s32.totalorder %s17, 1
      %p170 = por %p168, %p169
      %p171 = scmp.ne.s32.totalorder %s163, %s166
      %p172 = scmp.eq.s32.totalorder %s17, 0
      %p173 = por %p171, %p172
      %p174 = scmp.ne.s32.totalorder %s163, %s166
      %p175 = scmp.eq.s32.totalorder %s22, 1
      %p176 = por %p174, %p175
      %p177 = scmp.ne.s32.totalorder %s166, %s167
      %p178 = scmp.eq.s32.totalorder %s22, 0
      %p179 = por %p177, %p178
      %p180 = scmp.ne.s32.totalorder %s166, %s167
      %p181 = scmp.eq.s32.totalorder %s23, 1
      %p182 = por %p180, %p181
      %p184 = scmp.ne.s32.totalorder %s167, %s183
      %p185 = scmp.eq.s32.totalorder %s23, 0
      %p186 = por %p184, %p185
      %p187 = scmp.le.s32.totalorder 1, %s17
      %p188 = scmp.lt.s32.totalorder %s17, 3
      %p189 = pnand %p187, %p188
      %p190 = pneg %p189
      // Predicated region
      $region9: #{tpu_custom_call.1} parent=5 // pred_check
        _
      $region10: #{tpu_custom_call.1} parent=5 // pred_check_branch
        %192 = sbr.rel (%p189) target = $region12
      $region11: #{tpu_custom_call.1} parent=5 // pred_region
        %s193 = ssub.s32 %s17, 1
        // Predicated region
        $region13: #{tpu_custom_call.1} parent=11 // pred_check
          %p194 = pneg %p64
        $region14: #{tpu_custom_call.1} parent=11 // pred_check_branch
          %196 = sbr.rel (%p194) target = $region16
        $region15: #{tpu_custom_call.1} parent=11 // pred_region
          _
        $region16: #{tpu_custom_call.1} parent=11 // pred_fallthru
          _
        // Predicated region
        $region17: #{tpu_custom_call.1} parent=11 // pred_check
          %p197 = pneg %p85
        $region18: #{tpu_custom_call.1} parent=11 // pred_check_branch
          %199 = sbr.rel (%p197) target = $region20
        $region19: #{tpu_custom_call.1} parent=11 // pred_region
          _
        $region20: #{tpu_custom_call.1} parent=11 // pred_fallthru
          _
        // Predicated region
        $region21: #{tpu_custom_call.1} parent=11 // pred_check
          %p200 = pneg %p106
        $region22: #{tpu_custom_call.1} parent=11 // pred_check_branch
          %202 = sbr.rel (%p200) target = $region24
        $region23: #{tpu_custom_call.1} parent=11 // pred_region
          _
        $region24: #{tpu_custom_call.1} parent=11 // pred_fallthru
          _
        // Predicated region
        $region25: #{tpu_custom_call.1} parent=11 // pred_check
          %p203 = pneg %p127
        $region26: #{tpu_custom_call.1} parent=11 // pred_check_branch
          %205 = sbr.rel (%p203) target = $region28
        $region27: #{tpu_custom_call.1} parent=11 // pred_region
          _
        $region28: #{tpu_custom_call.1} parent=11 // pred_fallthru
          _
      $region12: #{tpu_custom_call.1} parent=5 // pred_fallthru
        _
      %p206 = scmp.lt.s32.totalorder %s17, 2
      // Predicated region
      $region29: #{tpu_custom_call.1} parent=5 // pred_check
        %p207 = pneg %p206
      $region30: #{tpu_custom_call.1} parent=5 // pred_check_branch
        %209 = sbr.rel (%p207) target = $region32
      $region31: #{tpu_custom_call.1} parent=5 // pred_region
        // Predicated region
        $region33: #{tpu_custom_call.1} parent=31 // pred_check
          %p210 = pneg %p37
        $region34: #{tpu_custom_call.1} parent=31 // pred_check_branch
          %212 = sbr.rel (%p210) target = $region36
        $region35: #{tpu_custom_call.1} parent=31 // pred_region
          %s213 = smul.u32 8, %s17
          %p214 = scmp.lt.s32.totalorder %s213, 15
          %s215 = scalar_select %p214, %s213, 15
          %s216 = smul.addr %s215, 8
          %s217 = scalar_lea.vmem %s0, %s216
          %s218 = smul.u32 8, %s17
        $region36: #{tpu_custom_call.1} parent=31 // pred_fallthru
          _
      $region32: #{tpu_custom_call.1} parent=5 // pred_fallthru
        _
      %p219 = scmp.le.s32.totalorder 1, %s17
      %p220 = scmp.lt.s32.totalorder %s17, 3
      %p221 = pnand %p219, %p220
      %p222 = pneg %p221
      // Predicated region
      $region37: #{tpu_custom_call.1} parent=5 // pred_check
        _
      $region38: #{tpu_custom_call.1} parent=5 // pred_check_branch
        %224 = sbr.rel (%p221) target = $region40
      $region39: #{tpu_custom_call.1} parent=5 // pred_region
        %s225 = ssub.s32 %s17, 1
        %s226 = smul.u32 8, %s22
        %p227 = scmp.lt.s32.totalorder %s226, 15
        %s228 = scalar_select %p227, %s226, 15
        %s229 = smul.addr %s228, 8
        %s230 = scalar_lea.vmem %s0, %s229
        %p231 = pneg %p43
        %p232 = pneg %p40
        %p233 = pneg %p64
        %p234 = pneg %p61
        %p235 = pneg %p85
        %p236 = pneg %p82
        %p237 = pneg %p106
        %p238 = pneg %p103
        %p239 = pneg %p127
        %p240 = pneg %p124
        %p241 = pneg %p153
        %p242 = pneg %p150
        %s243 = sand.u32 %s140, 1
        %s244 = scalar_lea.sflag [#allocation4], %s243
        %s245 = sand.u32 %s140, 1
        %s246 = smul.addr %s245, 8
        %s247 = scalar_lea.vmem [#allocation3], %s246
        %p248 = pneg %p179
        %p249 = pneg %p176
        %p250 = scmp.lt.s32.totalorder %s22, 1
        %s251 = scalar_select %p250, %s22, 1
        %s252 = smul.addr %s251, 8
        %s253 = scalar_lea.vmem %s6, %s252
        %s254 = smul.u32 8, %s22
        %p255 = scmp.lt.s32.totalorder %s254, 15
        %s256 = scalar_select %p255, %s254, 15
        %s257 = smul.addr %s256, 8
        %s258 = scalar_lea.vmem %s0, %s257
        %s259 = smul.u32 8, %s22
        %p260 = scmp.lt.s32.totalorder %s22, 1
        %s261 = scalar_select %p260, %s22, 1
        %s262 = smul.addr %s261, 8
        %s263 = scalar_lea.vmem %s6, %s262
        %v264 = vld [vmem:[%s258] sm:$0xff]
        %v265 = vld [vmem:[%s258 + $0x8] sm:$0xff]
        %v266 = vld [vmem:[%s258 + $0x10] sm:$0xff]
        %v267 = vld [vmem:[%s258 + $0x18] sm:$0xff]
        %v268 = vld [vmem:[%s258 + $0x20] sm:$0xff]
        %v269 = vld [vmem:[%s258 + $0x28] sm:$0xff]
        %v270 = vld [vmem:[%s258 + $0x30] sm:$0xff]
        %v271 = vld [vmem:[%s258 + $0x38] sm:$0xff]
        %v272 = vld [vmem:[%s1] sm:$0xff]
        %v273 = vld [vmem:[%s1 + $0x8] sm:$0xff]
        %v274 = vld [vmem:[%s1 + $0x10] sm:$0xff]
        %v275 = vld [vmem:[%s1 + $0x18] sm:$0xff]
        %v276 = vld [vmem:[%s1 + $0x20] sm:$0xff]
        %v277 = vld [vmem:[%s1 + $0x28] sm:$0xff]
        %v278 = vld [vmem:[%s1 + $0x30] sm:$0xff]
        %v279 = vld [vmem:[%s1 + $0x38] sm:$0xff]
        %v280 = vld [vmem:[%s1 + $0x40] sm:$0xff]
        %v281 = vld [vmem:[%s1 + $0x48] sm:$0xff]
        %v282 = vld [vmem:[%s1 + $0x50] sm:$0xff]
        %v283 = vld [vmem:[%s1 + $0x58] sm:$0xff]
        %v284 = vld [vmem:[%s1 + $0x60] sm:$0xff]
        %v285 = vld [vmem:[%s1 + $0x68] sm:$0xff]
        %v286 = vld [vmem:[%s1 + $0x70] sm:$0xff]
        %v287 = vld [vmem:[%s1 + $0x78] sm:$0xff]
        %v288 = vld [vmem:[%s2] sm:$0x1]
        %v290 = vperm.slane %v288, 0
        %292 = vmatpush.msra.mxu0 %v287
        %293 = vmatpush.msra.mxu0 %v286
        %294 = vmatpush.msra.mxu0 %v285
        %295 = vmatpush.msra.mxu0 %v284
        %296 = vmatpush.msra.mxu0 %v283
        %297 = vmatpush.msra.mxu0 %v282
        %298 = vmatpush.msra.mxu0 %v281
        %299 = vmatpush.msra.mxu0 %v280
        %300 = vmatpush.msra.mxu0 %v279
        %301 = vmatpush.msra.mxu0 %v278
        %302 = vmatpush.msra.mxu0 %v277
        %303 = vmatpush.msra.mxu0 %v276
        %304 = vmatpush.msra.mxu0 %v275
        %305 = vmatpush.msra.mxu0 %v274
        %306 = vmatpush.msra.mxu0 %v273
        %307 = vmatpush.msra.mxu0 %v272
        %308 = vmatmul.f32.gmra.mxu0 %v264
        %v309 = vpop.f32.mrf.mxu0
        %v310 = vadd.f32 %v290, %v309
        %311 = vmatmul.f32.gmra.mxu0 %v265
        %v312 = vpop.f32.mrf.mxu0
        %v313 = vadd.f32 %v290, %v312
        %314 = vmatmul.f32.gmra.mxu0 %v266
        %v315 = vpop.f32.mrf.mxu0
        %v316 = vadd.f32 %v290, %v315
        %317 = vmatmul.f32.gmra.mxu0 %v267
        %v318 = vpop.f32.mrf.mxu0
        %v319 = vadd.f32 %v290, %v318
        %320 = vmatmul.f32.gmra.mxu0 %v268
        %v321 = vpop.f32.mrf.mxu0
        %v322 = vadd.f32 %v290, %v321
        %323 = vmatmul.f32.gmra.mxu0 %v269
        %v324 = vpop.f32.mrf.mxu0
        %v325 = vadd.f32 %v290, %v324
        %326 = vmatmul.f32.gmra.mxu0 %v270
        %v327 = vpop.f32.mrf.mxu0
        %v328 = vadd.f32 %v290, %v327
        %329 = vmatmul.f32.gmra.mxu0 %v271
        %v330 = vpop.f32.mrf.mxu0
        %v331 = vadd.f32 %v290, %v330
        %332 = vdwg.mxu0
        %v333 = vtanh.pop %v310
        %v334 = vtanh.pop %v313
        %v335 = vtanh.pop %v316
        %v336 = vtanh.pop %v319
        %v337 = vtanh.pop %v322
        %v338 = vtanh.pop %v325
        %v339 = vtanh.pop %v328
        %v340 = vtanh.pop %v331
        %v341 = vld [vmem:[%s3] sm:$0x1]
        %v343 = vperm.slane %v341, 0
        %v345 = vmul.f32 %v333, %v343
        %v346 = vmul.f32 %v334, %v343
        %v347 = vmul.f32 %v335, %v343
        %v348 = vmul.f32 %v336, %v343
        %v349 = vmul.f32 %v337, %v343
        %v350 = vmul.f32 %v338, %v343
        %v351 = vmul.f32 %v339, %v343
        %v352 = vmul.f32 %v340, %v343
        %vm353 = vcmask 261120
        %v354 = vsel %vm353, %v345, 0.0
        %355 = vadd.xlane.f32.xlu0 %v354
        %v356 = vpop.xlane.xlu0 %355
        %v357 = vsel %vm353, %v346, 0.0
        %358 = vadd.xlane.f32.xlu0 %v357
        %v359 = vpop.xlane.xlu0 %358
        %v360 = vsel %vm353, %v347, 0.0
        %361 = vadd.xlane.f32.xlu0 %v360
        %v362 = vpop.xlane.xlu0 %361
        %v363 = vsel %vm353, %v348, 0.0
        %364 = vadd.xlane.f32.xlu0 %v363
        %v365 = vpop.xlane.xlu0 %364
        %v366 = vsel %vm353, %v349, 0.0
        %367 = vadd.xlane.f32.xlu0 %v366
        %v368 = vpop.xlane.xlu0 %367
        %v369 = vsel %vm353, %v350, 0.0
        %370 = vadd.xlane.f32.xlu0 %v369
        %v371 = vpop.xlane.xlu0 %370
        %v372 = vsel %vm353, %v351, 0.0
        %373 = vadd.xlane.f32.xlu0 %v372
        %v374 = vpop.xlane.xlu0 %373
        %v375 = vsel %vm353, %v352, 0.0
        %376 = vadd.xlane.f32.xlu0 %v375
        %v377 = vpop.xlane.xlu0 %376
        %s378 = sld [smem:[#allocation2]]
        %v379 = vstv %s378
        %v380 = vadd.f32 %v356, %v379
        %v381 = vadd.f32 %v359, %v379
        %v382 = vadd.f32 %v362, %v379
        %v383 = vadd.f32 %v365, %v379
        %v384 = vadd.f32 %v368, %v379
        %v385 = vadd.f32 %v371, %v379
        %v386 = vadd.f32 %v374, %v379
        %v387 = vadd.f32 %v377, %v379
        %v396 = vlaneseq
        %v397 = vand.u32 %v396, 127
        %v398 = vperm.slane %v380, %v397
        %v399 = vperm.slane %v381, %v397
        %v400 = vperm.slane %v382, %v397
        %v401 = vperm.slane %v383, %v397
        %v402 = vperm.slane %v384, %v397
        %v403 = vperm.slane %v385, %v397
        %v404 = vperm.slane %v386, %v397
        %v405 = vperm.slane %v387, %v397
        %vm406 = vcmask 1041409
        %v407 = vsel %vm406, %v399, %v398
        %vm408 = vcmask 1042434
        %v409 = vsel %vm408, %v400, %v407
        %vm410 = vcmask 1043459
        %v411 = vsel %vm410, %v401, %v409
        %vm412 = vcmask 1044484
        %v413 = vsel %vm412, %v402, %v411
        %vm414 = vcmask 1045509
        %v415 = vsel %vm414, %v403, %v413
        %vm416 = vcmask 1046534
        %v417 = vsel %vm416, %v404, %v415
        %vm418 = vcmask 1047559
        %v419 = vsel %vm418, %v405, %v417
        %vm421 = vcmask 64512
        %v422 = vsel %vm421, %v419, -inf
        %423 = vmax.xlane.f32.xlu0 %v422
        %v424 = vpop.xlane.xlu0 %423
        %v426 = vperm.slane %v424, 0
        %v427 = vperm.slane %v424, 1
        %v428 = vperm.slane %v424, 2
        %v429 = vperm.slane %v424, 3
        %v430 = vperm.slane %v424, 4
        %v431 = vperm.slane %v424, 5
        %v432 = vperm.slane %v424, 6
        %v433 = vperm.slane %v424, 7
        %v442 = vsub.f32 %v380, %v426
        %v443 = vsub.f32 %v381, %v427
        %v444 = vsub.f32 %v382, %v428
        %v445 = vsub.f32 %v383, %v429
        %v446 = vsub.f32 %v384, %v430
        %v447 = vsub.f32 %v385, %v431
        %v448 = vsub.f32 %v386, %v432
        %v449 = vsub.f32 %v387, %v433
        %v450 = vmul.f32 %v442, 1.442695
        %v451 = vpow.pop %v450
        %v452 = vmul.f32 %v443, 1.442695
        %v453 = vpow.pop %v452
        %v454 = vmul.f32 %v444, 1.442695
        %v455 = vpow.pop %v454
        %v456 = vmul.f32 %v445, 1.442695
        %v457 = vpow.pop %v456
        %v458 = vmul.f32 %v446, 1.442695
        %v459 = vpow.pop %v458
        %v460 = vmul.f32 %v447, 1.442695
        %v461 = vpow.pop %v460
        %v462 = vmul.f32 %v448, 1.442695
        %v463 = vpow.pop %v462
        %v464 = vmul.f32 %v449, 1.442695
        %v465 = vpow.pop %v464
        %474 = vset.pattern.permute.xlu0 0
        %475 = vperm.xlu0 %474, %v451
        %v476 = vpop.permute.xlu0 %475
        %477 = vset.pattern.permute.xlu0 0
        %478 = vperm.xlu0 %477, %v453
        %v479 = vpop.permute.xlu0 %478
        %480 = vset.pattern.permute.xlu0 0
        %481 = vperm.xlu0 %480, %v455
        %v482 = vpop.permute.xlu0 %481
        %483 = vset.pattern.permute.xlu0 0
        %484 = vperm.xlu0 %483, %v457
        %v485 = vpop.permute.xlu0 %484
        %486 = vset.pattern.permute.xlu0 0
        %487 = vperm.xlu0 %486, %v459
        %v488 = vpop.permute.xlu0 %487
        %489 = vset.pattern.permute.xlu0 0
        %490 = vperm.xlu0 %489, %v461
        %v491 = vpop.permute.xlu0 %490
        %492 = vset.pattern.permute.xlu0 0
        %493 = vperm.xlu0 %492, %v463
        %v494 = vpop.permute.xlu0 %493
        %495 = vset.pattern.permute.xlu0 0
        %496 = vperm.xlu0 %495, %v465
        %v497 = vpop.permute.xlu0 %496
        %v498 = vperm.slane %v476, %v397
        %v499 = vperm.slane %v479, %v397
        %v500 = vperm.slane %v482, %v397
        %v501 = vperm.slane %v485, %v397
        %v502 = vperm.slane %v488, %v397
        %v503 = vperm.slane %v491, %v397
        %v504 = vperm.slane %v494, %v397
        %v505 = vperm.slane %v497, %v397
        %v506 = vsel %vm406, %v499, %v498
        %v507 = vsel %vm408, %v500, %v506
        %v508 = vsel %vm410, %v501, %v507
        %v509 = vsel %vm412, %v502, %v508
        %v510 = vsel %vm414, %v503, %v509
        %v511 = vsel %vm416, %v504, %v510
        %v512 = vsel %vm418, %v505, %v511
        %v514 = vsel %vm421, %v512, 0.0
        %515 = vadd.xlane.f32.xlu0 %v514
        %v516 = vpop.xlane.xlu0 %515
        %v518 = vperm.slane %v516, 0
        %v519 = vperm.slane %v516, 1
        %v520 = vperm.slane %v516, 2
        %v521 = vperm.slane %v516, 3
        %v522 = vperm.slane %v516, 4
        %v523 = vperm.slane %v516, 5
        %v524 = vperm.slane %v516, 6
        %v525 = vperm.slane %v516, 7
        %v534 = vrcp.pop %v518
        %v535 = vmul.f32 %v518, %v534
        %v536 = vsub.f32 1.0, %v535
        %v537 = vmul.f32 %v534, %v536
        %v538 = vadd.f32 %v534, %v537
        %vm539 = vweird.f32 %v518
        %vm540 = vweird.f32 %v534
        %vm541 = vmor %vm539, %vm540
        %v542 = vsel %vm541, %v534, %v538
        %v543 = vand.u32 2147483647, %v518
        %vm544 = vcmp.eq.f32.partialorder %v543, 8.507059e+37
        %v545 = vand.u32 %v518, 2147483648
        %v546 = vor.u32 1.1754944e-38, %v545
        %v547 = vsel %vm544, %v546, %v542
        %v548 = vmul.f32 %v451, %v547
        %v549 = vrcp.pop %v519
        %v550 = vmul.f32 %v519, %v549
        %v551 = vsub.f32 1.0, %v550
        %v552 = vmul.f32 %v549, %v551
        %v553 = vadd.f32 %v549, %v552
        %vm554 = vweird.f32 %v519
        %vm555 = vweird.f32 %v549
        %vm556 = vmor %vm554, %vm555
        %v557 = vsel %vm556, %v549, %v553
        %v558 = vand.u32 2147483647, %v519
        %vm559 = vcmp.eq.f32.partialorder %v558, 8.507059e+37
        %v560 = vand.u32 %v519, 2147483648
        %v561 = vor.u32 1.1754944e-38, %v560
        %v562 = vsel %vm559, %v561, %v557
        %v563 = vmul.f32 %v453, %v562
        %v564 = vrcp.pop %v520
        %v565 = vmul.f32 %v520, %v564
        %v566 = vsub.f32 1.0, %v565
        %v567 = vmul.f32 %v564, %v566
        %v568 = vadd.f32 %v564, %v567
        %vm569 = vweird.f32 %v520
        %vm570 = vweird.f32 %v564
        %vm571 = vmor %vm569, %vm570
        %v572 = vsel %vm571, %v564, %v568
        %v573 = vand.u32 2147483647, %v520
        %vm574 = vcmp.eq.f32.partialorder %v573, 8.507059e+37
        %v575 = vand.u32 %v520, 2147483648
        %v576 = vor.u32 1.1754944e-38, %v575
        %v577 = vsel %vm574, %v576, %v572
        %v578 = vmul.f32 %v455, %v577
        %v579 = vrcp.pop %v521
        %v580 = vmul.f32 %v521, %v579
        %v581 = vsub.f32 1.0, %v580
        %v582 = vmul.f32 %v579, %v581
        %v583 = vadd.f32 %v579, %v582
        %vm584 = vweird.f32 %v521
        %vm585 = vweird.f32 %v579
        %vm586 = vmor %vm584, %vm585
        %v587 = vsel %vm586, %v579, %v583
        %v588 = vand.u32 2147483647, %v521
        %vm589 = vcmp.eq.f32.partialorder %v588, 8.507059e+37
        %v590 = vand.u32 %v521, 2147483648
        %v591 = vor.u32 1.1754944e-38, %v590
        %v592 = vsel %vm589, %v591, %v587
        %v593 = vmul.f32 %v457, %v592
        %v594 = vrcp.pop %v522
        %v595 = vmul.f32 %v522, %v594
        %v596 = vsub.f32 1.0, %v595
        %v597 = vmul.f32 %v594, %v596
        %v598 = vadd.f32 %v594, %v597
        %vm599 = vweird.f32 %v522
        %vm600 = vweird.f32 %v594
        %vm601 = vmor %vm599, %vm600
        %v602 = vsel %vm601, %v594, %v598
        %v603 = vand.u32 2147483647, %v522
        %vm604 = vcmp.eq.f32.partialorder %v603, 8.507059e+37
        %v605 = vand.u32 %v522, 2147483648
        %v606 = vor.u32 1.1754944e-38, %v605
        %v607 = vsel %vm604, %v606, %v602
        %v608 = vmul.f32 %v459, %v607
        %v609 = vrcp.pop %v523
        %v610 = vmul.f32 %v523, %v609
        %v611 = vsub.f32 1.0, %v610
        %v612 = vmul.f32 %v609, %v611
        %v613 = vadd.f32 %v609, %v612
        %vm614 = vweird.f32 %v523
        %vm615 = vweird.f32 %v609
        %vm616 = vmor %vm614, %vm615
        %v617 = vsel %vm616, %v609, %v613
        %v618 = vand.u32 2147483647, %v523
        %vm619 = vcmp.eq.f32.partialorder %v618, 8.507059e+37
        %v620 = vand.u32 %v523, 2147483648
        %v621 = vor.u32 1.1754944e-38, %v620
        %v622 = vsel %vm619, %v621, %v617
        %v623 = vmul.f32 %v461, %v622
        %v624 = vrcp.pop %v524
        %v625 = vmul.f32 %v524, %v624
        %v626 = vsub.f32 1.0, %v625
        %v627 = vmul.f32 %v624, %v626
        %v628 = vadd.f32 %v624, %v627
        %vm629 = vweird.f32 %v524
        %vm630 = vweird.f32 %v624
        %vm631 = vmor %vm629, %vm630
        %v632 = vsel %vm631, %v624, %v628
        %v633 = vand.u32 2147483647, %v524
        %vm634 = vcmp.eq.f32.partialorder %v633, 8.507059e+37
        %v635 = vand.u32 %v524, 2147483648
        %v636 = vor.u32 1.1754944e-38, %v635
        %v637 = vsel %vm634, %v636, %v632
        %v638 = vmul.f32 %v463, %v637
        %v639 = vrcp.pop %v525
        %v640 = vmul.f32 %v525, %v639
        %v641 = vsub.f32 1.0, %v640
        %v642 = vmul.f32 %v639, %v641
        %v643 = vadd.f32 %v639, %v642
        %vm644 = vweird.f32 %v525
        %vm645 = vweird.f32 %v639
        %vm646 = vmor %vm644, %vm645
        %v647 = vsel %vm646, %v639, %v643
        %v648 = vand.u32 2147483647, %v525
        %vm649 = vcmp.eq.f32.partialorder %v648, 8.507059e+37
        %v650 = vand.u32 %v525, 2147483648
        %v651 = vor.u32 1.1754944e-38, %v650
        %v652 = vsel %vm649, %v651, %v647
        %v653 = vmul.f32 %v465, %v652
        %662 = vset.pattern.permute.xlu0 0
        %663 = vperm.xlu0 %662, %v548
        %v664 = vpop.permute.xlu0 %663
        %665 = vset.pattern.permute.xlu0 0
        %666 = vperm.xlu0 %665, %v563
        %v667 = vpop.permute.xlu0 %666
        %668 = vset.pattern.permute.xlu0 0
        %669 = vperm.xlu0 %668, %v578
        %v670 = vpop.permute.xlu0 %669
        %671 = vset.pattern.permute.xlu0 0
        %672 = vperm.xlu0 %671, %v593
        %v673 = vpop.permute.xlu0 %672
        %674 = vset.pattern.permute.xlu0 0
        %675 = vperm.xlu0 %674, %v608
        %v676 = vpop.permute.xlu0 %675
        %677 = vset.pattern.permute.xlu0 0
        %678 = vperm.xlu0 %677, %v623
        %v679 = vpop.permute.xlu0 %678
        %680 = vset.pattern.permute.xlu0 0
        %681 = vperm.xlu0 %680, %v638
        %v682 = vpop.permute.xlu0 %681
        %683 = vset.pattern.permute.xlu0 0
        %684 = vperm.xlu0 %683, %v653
        %v685 = vpop.permute.xlu0 %684
        %v686 = vperm.slane %v664, %v397
        %v687 = vperm.slane %v667, %v397
        %v688 = vperm.slane %v670, %v397
        %v689 = vperm.slane %v673, %v397
        %v690 = vperm.slane %v676, %v397
        %v691 = vperm.slane %v679, %v397
        %v692 = vperm.slane %v682, %v397
        %v693 = vperm.slane %v685, %v397
        %v694 = vsel %vm406, %v687, %v686
        %v695 = vsel %vm408, %v688, %v694
        %v696 = vsel %vm410, %v689, %v695
        %v697 = vsel %vm412, %v690, %v696
        %v698 = vsel %vm414, %v691, %v697
        %v699 = vsel %vm416, %v692, %v698
        %v700 = vsel %vm418, %v693, %v699
        %702 = vst.msk [vmem:[%s263] sm:$0xff] %vm421, %v700
        %v703 = vlaneseq
        %v704 = vshrl.u32 %v703, 7
        %v705 = vmul.u32 %v704, 8
        %vm706 = vcmp.ge.s32.totalorder %v397, %v705
        %v707 = vadd.s32 %v705, 8
        %vm708 = vcmp.lt.s32.totalorder %v397, %v707
        %vm709 = vmand %vm706, %vm708
        %v710 = vadd.s32 %v397, 4294967288
        %v711 = vperm.slane %v381, %v710
        %vm712 = vcmask 130112
        %v713 = vsel %vm712, %v711, %v398
        %v714 = vadd.s32 %v397, 4294967280
        %v715 = vperm.slane %v382, %v714
        %vm716 = vcmask 195712
        %v717 = vsel %vm716, %v715, %v713
        %v718 = vadd.s32 %v397, 4294967272
        %v719 = vperm.slane %v383, %v718
        %vm720 = vcmask 261312
        %v721 = vsel %vm720, %v719, %v717
        %v722 = vadd.s32 %v397, 4294967264
        %v723 = vperm.slane %v384, %v722
        %vm724 = vcmask 326912
        %v725 = vsel %vm724, %v723, %v721
        %v726 = vadd.s32 %v397, 4294967256
        %v727 = vperm.slane %v385, %v726
        %vm728 = vcmask 392512
        %v729 = vsel %vm728, %v727, %v725
        %v730 = vadd.s32 %v397, 4294967248
        %v731 = vperm.slane %v386, %v730
        %vm732 = vcmask 458112
        %v733 = vsel %vm732, %v731, %v729
        %v734 = vadd.s32 %v397, 4294967240
        %v735 = vperm.slane %v387, %v734
        %vm736 = vcmask 523712
        %v737 = vsel %vm736, %v735, %v733
        %v738 = vsel %vm408, %v737, %v737
        %v739 = vsel %vm410, %v737, %v738
        %v740 = vsel %vm412, %v737, %v739
        %v741 = vsel %vm414, %v737, %v740
        %v742 = vsel %vm416, %v737, %v741
        %v743 = vsel %vm418, %v737, %v742
        %v745 = vsel %vm709, %v743, -1e+30
        %vm746 = vcmask 523264
        %v747 = vsel %vm746, %v745, -inf
        %748 = vmax.xlane.f32.xlu0 %v747
        %v749 = vpop.xlane.xlu0 %748
        %v750 = vsub.f32 %v745, %v749
        %v751 = vmul.f32 %v750, 1.442695
        %v752 = vpow.pop %v751
        %v753 = vsel %vm746, %v752, 0.0
        %754 = vadd.xlane.f32.xlu0 %v753
        %v755 = vpop.xlane.xlu0 %754
        %v756 = vrcp.pop %v755
        %v757 = vmul.f32 %v755, %v756
        %v758 = vsub.f32 1.0, %v757
        %v759 = vmul.f32 %v756, %v758
        %v760 = vadd.f32 %v756, %v759
        %vm761 = vweird.f32 %v755
        %vm762 = vweird.f32 %v756
        %vm763 = vmor %vm761, %vm762
        %v764 = vsel %vm763, %v756, %v760
        %v765 = vand.u32 2147483647, %v755
        %vm766 = vcmp.eq.f32.partialorder %v765, 8.507059e+37
        %v767 = vand.u32 %v755, 2147483648
        %v768 = vor.u32 1.1754944e-38, %v767
        %v769 = vsel %vm766, %v768, %v764
        %v770 = vmul.f32 %v752, %v769
        %v772 = vsel %vm746, %v770, 0
        %774 = vmatpush.msra.mxu0 0.0
        %775 = vmatpush.msra.mxu0 0.0
        %776 = vmatpush.msra.mxu0 0.0
        %777 = vmatpush.msra.mxu0 0.0
        %778 = vmatpush.msra.mxu0 0.0
        %779 = vmatpush.msra.mxu0 0.0
        %780 = vmatpush.msra.mxu0 0.0
        %781 = vmatpush.msra.mxu0 0.0
        %782 = vmatpush.msra.mxu0 %v271
        %783 = vmatpush.msra.mxu0 %v270
        %784 = vmatpush.msra.mxu0 %v269
        %785 = vmatpush.msra.mxu0 %v268
        %786 = vmatpush.msra.mxu0 %v267
        %787 = vmatpush.msra.mxu0 %v266
        %788 = vmatpush.msra.mxu0 %v265
        %789 = vmatpush.msra.mxu0 %v264
        %790 = vmatmul.f32.gmra.mxu0 %v772
        %v791 = vpop.f32.mrf.mxu0
        %v792 = vadd.f32 0.0, %v791
        %793 = vdwg.mxu0
        %794 = vst [vmem:[%s247] sm:$0xff] %v792
        %s795 = sand.u32 %s140, 1
        %s796 = scalar_lea.sflag [#allocation4], %s795
        %s797 = sand.u32 %s140, 1
        %s798 = smul.addr %s797, 8
        %s799 = scalar_lea.vmem [#allocation3], %s798
        %p800 = scmp.lt.s32.totalorder %s22, 1
        %s801 = scalar_select %p800, %s22, 1
        %s802 = smul.addr %s801, 8
        %s803 = scalar_lea.vmem %s6, %s802
        // Predicated region
        $region41: #{tpu_custom_call.1} parent=39 // pred_check
          %p804 = pneg %p150
        $region42: #{tpu_custom_call.1} parent=39 // pred_check_branch
          %806 = sbr.rel (%p804) target = $region44
        $region43: #{tpu_custom_call.1} parent=39 // pred_region
          %808 = vsyncadd %s796, 0
          %s809 = smul.addr %s22, 8
          %s810 = scalar_lea.hbm %s5, %s809
          %s812 = sshll.u32 %s799, 4
          %s813 = int_to_ptr.vmem [resolvable:$true] %s812
          %s814 = sshll.u32 %s810, 4
          %s815 = int_to_ptr.hbm [resolvable:$true] %s814
          %817 = dma.vmem_to_hbm [thread:$0]  %s813, 128, %s815, %s796
        $region44: #{tpu_custom_call.1} parent=39 // pred_fallthru
          _
        // Predicated region
        $region45: #{tpu_custom_call.1} parent=39 // pred_check
          %p818 = pneg %p176
        $region46: #{tpu_custom_call.1} parent=39 // pred_check_branch
          %820 = sbr.rel (%p818) target = $region48
        $region47: #{tpu_custom_call.1} parent=39 // pred_region
          _
        $region48: #{tpu_custom_call.1} parent=39 // pred_fallthru
          _
      $region40: #{tpu_custom_call.1} parent=5 // pred_fallthru
        _
      %p821 = scmp.le.s32.totalorder 2, %s17
      // Predicated region
      $region49: #{tpu_custom_call.1} parent=5 // pred_check
        %p822 = pneg %p821
      $region50: #{tpu_custom_call.1} parent=5 // pred_check_branch
        %824 = sbr.rel (%p822) target = $region52
      $region51: #{tpu_custom_call.1} parent=5 // pred_region
        %s825 = ssub.s32 %s17, 2
        // Predicated region
        $region53: #{tpu_custom_call.1} parent=51 // pred_check
          %p826 = pneg %p156
        $region54: #{tpu_custom_call.1} parent=51 // pred_check_branch
          %828 = sbr.rel (%p826) target = $region56
        $region55: #{tpu_custom_call.1} parent=51 // pred_region
          %s829 = sand.u32 %s141, 1
          %s830 = scalar_lea.sflag [#allocation4], %s829
          %s831 = sand.u32 %s141, 1
          %s832 = smul.addr %s831, 8
          %s833 = scalar_lea.vmem [#allocation3], %s832
          %835 = dma.done %s830, 128
        $region56: #{tpu_custom_call.1} parent=51 // pred_fallthru
          _
        // Predicated region
        $region57: #{tpu_custom_call.1} parent=51 // pred_check
          %p836 = pneg %p182
        $region58: #{tpu_custom_call.1} parent=51 // pred_check_branch
          %838 = sbr.rel (%p836) target = $region60
        $region59: #{tpu_custom_call.1} parent=51 // pred_region
          %p839 = scmp.lt.s32.totalorder %s23, 1
          %s840 = scalar_select %p839, %s23, 1
          %s841 = smul.addr %s840, 8
          %s842 = scalar_lea.vmem %s6, %s841
        $region60: #{tpu_custom_call.1} parent=51 // pred_fallthru
          _
      $region52: #{tpu_custom_call.1} parent=5 // pred_fallthru
        _
    $region6: #{tpu_custom_call.1} parent=1 // loop_footer
      %s21 = sadd.s32 1, %s17
    $region7: #{tpu_custom_call.1} parent=1 // loop_footer_branch
      %16 = sbr.rel target = $region3
    $region8: #{tpu_custom_call.1} parent=1 // loop_exit
      _
    %843 = vsyncpa [#allocation4], 1
    %s844 = scalar_lea.sflag [#allocation4], 1
    %845 = vsyncpa %s844, 1

</llo_original>
